<compile_context>
chip_gen: v7x
topology: tpu7x:2x2x1
jax: 0.10.0
libtpu: 0.0.40
codegen_flags: <defaults>
</compile_context>

<pallas_src>
import math

import jax
import jax.numpy as jnp
from jax.experimental import pallas as pl
from jax.experimental.pallas import tpu as pltpu

LANE = 128  # vreg lane width: hidden dim is padded to this once, at init


def _round_up(x, m):
    return (x + m - 1) // m * m


def mlp_kernel(x_ref, w1_ref, b1_ref, w2_ref, b2_ref, w3_ref, b3_ref, o_ref):
    # layer 1: Linear(n -> h) + ReLU   (K = n is small; MXU pads K internally)
    h1 = jnp.dot(x_ref[...], w1_ref[...], preferred_element_type=jnp.float32)
    h1 = jnp.maximum(h1 + b1_ref[...], 0.0)
    # layer 2: Linear(h -> h) + ReLU
    h2 = jnp.dot(h1, w2_ref[...], preferred_element_type=jnp.float32)
    h2 = jnp.maximum(h2 + b2_ref[...], 0.0)
    # layer 3: Linear(h -> n) + tanh
    out = jnp.dot(h2, w3_ref[...], preferred_element_type=jnp.float32)
    o_ref[...] = jnp.tanh(out + b3_ref[...]).astype(o_ref.dtype)


def pad_params(params, lane=LANE):
    """One-time lane padding of the hidden dimension (call once at init).

    Only the hidden dim is padded (h -> h_pad); the input/output feature dim n
    is left untouched so x and the output stay unpadded in HBM.  Zero padding
    is semantics-preserving: padded bias entries are 0, ReLU(0)=0, and padded
    rows/cols of the weights contribute nothing.
    """
    w1, b1, w2, b2, w3, b3 = params
    n, h = w1.shape
    h_pad = _round_up(h, lane)
    w1p = jnp.zeros((n, h_pad), w1.dtype).at[:, :h].set(w1)
    b1p = jnp.zeros((1, h_pad), b1.dtype).at[:, :h].set(b1)
    w2p = jnp.zeros((h_pad, h_pad), w2.dtype).at[:h, :h].set(w2)
    b2p = jnp.zeros((1, h_pad), b2.dtype).at[:, :h].set(b2)
    w3p = jnp.zeros((h_pad, n), w3.dtype).at[:h, :].set(w3)
    b3p = b3  # (1, n), no padding needed
    return (w1p, b1p, w2p, b2p, w3p, b3p)


def _vmem_limit_bytes(tb, n, h_pad):
    # Double-buffered x/out tiles + double-buffered resident params + room for
    # the (tb, h_pad) f32 intermediates, then clamp to 3/4 of physical VMEM
    # (hardware-aware: 64 MiB on v7x, 128 MiB on v5e/v6e).
    tile_bytes = 2 * 2 * tb * n * 4
    param_bytes = 2 * (n * h_pad + h_pad * h_pad + h_pad * n + 2 * h_pad + n) * 4
    interm_bytes = 2 * tb * h_pad * 4
    want = max(4 * (tile_bytes + param_bytes + interm_bytes), 32 * 1024 * 1024)
    try:
        cap = int(getattr(pltpu.get_tpu_info(), "vmem_capacity_bytes",
                          64 * 1024 * 1024))
    except Exception:
        cap = 64 * 1024 * 1024
    return min(want, (cap * 3) // 4)


def net_forward(x, padded_params, *, tb=512):
    """Fused MLP forward.

    x: (B, n) float32.  padded_params: output of pad_params() — pad once at
    init, not per call.
    """
    w1p, b1p, w2p, b2p, w3p, b3p = padded_params
    B, n = x.shape
    h_pad = w1p.shape[1]

    # Batch tile: large default to amortize per-step overhead; single step for
    # small batches.  Batch is only padded when not a multiple of the tile.
    tb = max(8, min(tb, _round_up(B, 8)))
    B_pad = _round_up(B, tb)
    xp = x if B_pad == B else jnp.zeros((B_pad, n), x.dtype).at[:B].set(x)

    grid = (B_pad // tb,)
    # x / out: (tb, n) moving blocks — n equals the full array dim, so no lane
    # padding in HBM is required (output stores are masked, which is cheaper
    # than padded-out HBM round trips at these sizes).
    x_spec = pl.BlockSpec((tb, n), lambda i: (i, 0))
    out_spec = pl.BlockSpec((tb, n), lambda i: (i, 0))
    # Weights/biases: full-array blocks with constant index maps -> resident
    # in VMEM across all grid steps.
    res = lambda shape: pl.BlockSpec(shape, lambda i: (0, 0))

    out = pl.pallas_call(
        mlp_kernel,
        out_shape=jax.ShapeDtypeStruct((B_pad, n), x.dtype),
        grid=grid,
        in_specs=[
            x_spec,
            res(w1p.shape), res(b1p.shape),
            res(w2p.shape), res(b2p.shape),
            res(w3p.shape), res(b3p.shape),
        ],
        out_specs=out_spec,
        compiler_params=pltpu.CompilerParams(
            dimension_semantics=("parallel",),
            vmem_limit_bytes=_vmem_limit_bytes(tb, n, h_pad),
        ),
    )(xp, w1p, b1p, w2p, b2p, w3p, b3p)

    return out if B_pad == B else out[:B]


def init_params(key, n, h):
    """Deterministic init mimicking PyTorch's default Linear init
    (uniform(-1/sqrt(fan_in), 1/sqrt(fan_in))).  Weights stored as
    (in_features, out_features) so y = x @ W + b."""
    ks = jax.random.split(key, 6)

    def lin(kw, kb, fan_in, fan_out):
        bound = 1.0 / math.sqrt(fan_in)
        w = jax.random.uniform(kw, (fan_in, fan_out), jnp.float32, -bound, bound)
        b = jax.random.uniform(kb, (1, fan_out), jnp.float32, -bound, bound)
        return w, b

    w1, b1 = lin(ks[0], ks[1], n, h)
    w2, b2 = lin(ks[2], ks[3], h, h)
    w3, b3 = lin(ks[4], ks[5], h, n)
    return (w1, b1, w2, b2, w3, b3)


def net_forward_ref(x, params):
    w1, b1, w2, b2, w3, b3 = params
    h1 = jnp.maximum(x @ w1 + b1, 0.0)
    h2 = jnp.maximum(h1 @ w2 + b2, 0.0)
    return jnp.tanh(h2 @ w3 + b3)


if __name__ == "__main__":
    key = jax.random.PRNGKey(0)
    k_x, k_p = jax.random.split(key)

    # Small, module-consistent shapes (MIMO detector: n symbols, h hidden).
    B, n, h = 256, 32, 64
    x = jax.random.normal(k_x, (B, n), jnp.float32)
    params = init_params(k_p, n, h)

    # One-time lane padding of the hidden dim (hoisted out of the call path).
    padded_params = pad_params(params)
    padded_params = jax.block_until_ready(padded_params)

    out = net_forward(x, padded_params, tb=512)
    out = jax.block_until_ready(out)

    ref = net_forward_ref(x, params)
    assert out.shape == (B, n)
    assert jnp.allclose(out, ref, atol=1e-5, rtol=1e-5), "mismatch vs reference"

    print("KERNEL_OK")
</pallas_src>

<mosaic_0001>
module attributes {stable_mosaic.version = 11 : i64} {
  func.func @mlp_kernel(%arg0: i32, %arg1: memref<256x32xf32, #tpu.memory_space<vmem>>, %arg2: memref<32x128xf32, #tpu.memory_space<vmem>>, %arg3: memref<1x128xf32, #tpu.memory_space<vmem>>, %arg4: memref<128x128xf32, #tpu.memory_space<vmem>>, %arg5: memref<1x128xf32, #tpu.memory_space<vmem>>, %arg6: memref<128x32xf32, #tpu.memory_space<vmem>>, %arg7: memref<1x32xf32, #tpu.memory_space<vmem>>, %arg8: memref<256x32xf32, #tpu.memory_space<vmem>>) attributes {dimension_semantics = [#tpu.dimension_semantics<parallel>], iteration_bounds = array<i64: 1>, scalar_prefetch = 0 : i64, scratch_operands = 0 : i64, tpu.core_type = #tpu.core_type<tc>, window_params = [{transform_indices = @transform_0, window_bounds = array<i64: 256, 32>}, {pipeline_mode = #tpu.pipeline_mode<synchronous>, transform_indices = @transform_1, window_bounds = array<i64: 32, 128>}, {pipeline_mode = #tpu.pipeline_mode<synchronous>, transform_indices = @transform_2, window_bounds = array<i64: 1, 128>}, {pipeline_mode = #tpu.pipeline_mode<synchronous>, transform_indices = @transform_3, window_bounds = array<i64: 128, 128>}, {pipeline_mode = #tpu.pipeline_mode<synchronous>, transform_indices = @transform_4, window_bounds = array<i64: 1, 128>}, {pipeline_mode = #tpu.pipeline_mode<synchronous>, transform_indices = @transform_5, window_bounds = array<i64: 128, 32>}, {pipeline_mode = #tpu.pipeline_mode<synchronous>, transform_indices = @transform_6, window_bounds = array<i64: 1, 32>}, {transform_indices = @transform_7, window_bounds = array<i64: 256, 32>}]} {
    %c0 = arith.constant 0 : index
    %c0_0 = arith.constant 0 : index
    %0 = vector.load %arg1[%c0, %c0_0] : memref<256x32xf32, #tpu.memory_space<vmem>>, vector<256x32xf32>
    %c0_1 = arith.constant 0 : index
    %c0_2 = arith.constant 0 : index
    %1 = vector.load %arg2[%c0_1, %c0_2] : memref<32x128xf32, #tpu.memory_space<vmem>>, vector<32x128xf32>
    %cst = arith.constant dense<0.000000e+00> : vector<256x128xf32>
    %2 = tpu.matmul %0, %1, %cst {dimension_numbers = #tpu.dot_dimension_numbers<[1], [0], [0], [1], [0, 0, 1, 1], [], []>} : vector<256x32xf32>, vector<32x128xf32>, vector<256x128xf32> -> vector<256x128xf32>
    %c0_3 = arith.constant 0 : index
    %c0_4 = arith.constant 0 : index
    %3 = vector.load %arg3[%c0_3, %c0_4] : memref<1x128xf32, #tpu.memory_space<vmem>>, vector<1x128xf32>
    %4 = vector.broadcast %3 : vector<1x128xf32> to vector<256x128xf32>
    %5 = arith.addf %2, %4 : vector<256x128xf32>
    %cst_5 = arith.constant 0.000000e+00 : f32
    %6 = vector.broadcast %cst_5 : f32 to vector<256x128xf32>
    %7 = arith.maximumf %5, %6 : vector<256x128xf32>
    %c0_6 = arith.constant 0 : index
    %c0_7 = arith.constant 0 : index
    %8 = vector.load %arg4[%c0_6, %c0_7] : memref<128x128xf32, #tpu.memory_space<vmem>>, vector<128x128xf32>
    %cst_8 = arith.constant dense<0.000000e+00> : vector<256x128xf32>
    %9 = tpu.matmul %7, %8, %cst_8 {dimension_numbers = #tpu.dot_dimension_numbers<[1], [0], [0], [1], [0, 0, 1, 1], [], []>} : vector<256x128xf32>, vector<128x128xf32>, vector<256x128xf32> -> vector<256x128xf32>
    %c0_9 = arith.constant 0 : index
    %c0_10 = arith.constant 0 : index
    %10 = vector.load %arg5[%c0_9, %c0_10] : memref<1x128xf32, #tpu.memory_space<vmem>>, vector<1x128xf32>
    %11 = vector.broadcast %10 : vector<1x128xf32> to vector<256x128xf32>
    %12 = arith.addf %9, %11 : vector<256x128xf32>
    %cst_11 = arith.constant 0.000000e+00 : f32
    %13 = vector.broadcast %cst_11 : f32 to vector<256x128xf32>
    %14 = arith.maximumf %12, %13 : vector<256x128xf32>
    %c0_12 = arith.constant 0 : index
    %c0_13 = arith.constant 0 : index
    %15 = vector.load %arg6[%c0_12, %c0_13] : memref<128x32xf32, #tpu.memory_space<vmem>>, vector<128x32xf32>
    %cst_14 = arith.constant dense<0.000000e+00> : vector<256x32xf32>
    %16 = tpu.matmul %14, %15, %cst_14 {dimension_numbers = #tpu.dot_dimension_numbers<[1], [0], [0], [1], [0, 0, 1, 1], [], []>} : vector<256x128xf32>, vector<128x32xf32>, vector<256x32xf32> -> vector<256x32xf32>
    %c0_15 = arith.constant 0 : index
    %c0_16 = arith.constant 0 : index
    %17 = vector.load %arg7[%c0_15, %c0_16] : memref<1x32xf32, #tpu.memory_space<vmem>>, vector<1x32xf32>
    %18 = vector.broadcast %17 : vector<1x32xf32> to vector<256x32xf32>
    %19 = arith.addf %16, %18 : vector<256x32xf32>
    %20 = math.tanh %19 : vector<256x32xf32>
    %c0_17 = arith.constant 0 : index
    %c0_18 = arith.constant 0 : index
    %21 = vector.load %arg8[%c0_17, %c0_18] : memref<256x32xf32, #tpu.memory_space<vmem>>, vector<256x32xf32>
    tpu.vector_store %arg8[%c0_17, %c0_18], %20 {strides = array<i32>} : memref<256x32xf32, #tpu.memory_space<vmem>>, vector<256x32xf32>,
    return
  }
  func.func @transform_0(%arg0: i32) -> (i32, i32) {
    %c0_i32 = arith.constant 0 : i32
    %c0_i32_0 = arith.constant 0 : i32
    return %arg0, %c0_i32 : i32, i32
  }
  func.func @transform_1(%arg0: i32) -> (i32, i32) {
    %c0_i32 = arith.constant 0 : i32
    %c0_i32_0 = arith.constant 0 : i32
    %c0_i32_1 = arith.constant 0 : i32
    return %c0_i32, %c0_i32_0 : i32, i32
  }
  func.func @transform_2(%arg0: i32) -> (i32, i32) {
    %c0_i32 = arith.constant 0 : i32
    %c0_i32_0 = arith.constant 0 : i32
    %c0_i32_1 = arith.constant 0 : i32
    return %c0_i32, %c0_i32_0 : i32, i32
  }
  func.func @transform_3(%arg0: i32) -> (i32, i32) {
    %c0_i32 = arith.constant 0 : i32
    %c0_i32_0 = arith.constant 0 : i32
    %c0_i32_1 = arith.constant 0 : i32
    return %c0_i32, %c0_i32_0 : i32, i32
  }
  func.func @transform_4(%arg0: i32) -> (i32, i32) {
    %c0_i32 = arith.constant 0 : i32
    %c0_i32_0 = arith.constant 0 : i32
    %c0_i32_1 = arith.constant 0 : i32
    return %c0_i32, %c0_i32_0 : i32, i32
  }
  func.func @transform_5(%arg0: i32) -> (i32, i32) {
    %c0_i32 = arith.constant 0 : i32
    %c0_i32_0 = arith.constant 0 : i32
    %c0_i32_1 = arith.constant 0 : i32
    return %c0_i32, %c0_i32_0 : i32, i32
  }
  func.func @transform_6(%arg0: i32) -> (i32, i32) {
    %c0_i32 = arith.constant 0 : i32
    %c0_i32_0 = arith.constant 0 : i32
    %c0_i32_1 = arith.constant 0 : i32
    return %c0_i32, %c0_i32_0 : i32, i32
  }
  func.func @transform_7(%arg0: i32) -> (i32, i32) {
    %c0_i32 = arith.constant 0 : i32
    %c0_i32_0 = arith.constant 0 : i32
    return %arg0, %c0_i32 : i32, i32
  }
}

</mosaic_0001>

<llo_original>
// kernel: tpu_custom_call.1
$region0: #{tpu_custom_call.1}
  #allocation0 [shape = 'u32[]', space=smem, size = 0x4, offset = 0x4, fixed_abs, tag = 'smem constant byte address 0x4 - core index']
  #allocation1 [shape = 'u32[144,128]{1,0:T(1,128)}', space=vmem, size = 0x12000, scoped, tag = 'internal scratch']
  %s0 = inlined_call_operand.vmem [shape: f32[256,32], index: 0, kind: input, shape index: {}]
  %s1 = inlined_call_operand.vmem [shape: f32[32,128], index: 1, kind: input, shape index: {}]
  %s2 = inlined_call_operand.vmem [shape: f32[1,128], index: 2, kind: input, shape index: {}]
  %s3 = inlined_call_operand.vmem [shape: f32[128,128], index: 3, kind: input, shape index: {}]
  %s4 = inlined_call_operand.vmem [shape: f32[1,128], index: 4, kind: input, shape index: {}]
  %s5 = inlined_call_operand.vmem [shape: f32[128,32], index: 5, kind: input, shape index: {}]
  %s6 = inlined_call_operand.vmem [shape: f32[1,32], index: 6, kind: input, shape index: {}]
  %s7 = inlined_call_operand.vmem [shape: f32[256,32], index: 7, kind: output, shape index: {}]
  %s8 = sld [smem:[#allocation0]]
  $region38: #{tpu_custom_call.1} parent=0
    _
  %s10 = ssub.s32 1, %s8
  %s11 = scalar_select 0, %s10, %s8
  // Predicated region
  $region2: #{tpu_custom_call.1} parent=0 // pred_check
    _
  $region3: #{tpu_custom_call.1} parent=0 // pred_check_branch
    %13 = sbr.rel (0) target = $region5
  $region4: #{tpu_custom_call.1} parent=0 // pred_region
    _
  $region5: #{tpu_custom_call.1} parent=0 // pred_fallthru
    _
  // Predicated region
  $region6: #{tpu_custom_call.1} parent=0 // pred_check
    _
  $region7: #{tpu_custom_call.1} parent=0 // pred_check_branch
    %15 = sbr.rel (0) target = $region9
  $region8: #{tpu_custom_call.1} parent=0 // pred_region
    _
  $region9: #{tpu_custom_call.1} parent=0 // pred_fallthru
    _
  // Predicated region
  $region10: #{tpu_custom_call.1} parent=0 // pred_check
    _
  $region11: #{tpu_custom_call.1} parent=0 // pred_check_branch
    %17 = sbr.rel (0) target = $region13
  $region12: #{tpu_custom_call.1} parent=0 // pred_region
    _
  $region13: #{tpu_custom_call.1} parent=0 // pred_fallthru
    _
  // Predicated region
  $region14: #{tpu_custom_call.1} parent=0 // pred_check
    _
  $region15: #{tpu_custom_call.1} parent=0 // pred_check_branch
    %19 = sbr.rel (0) target = $region17
  $region16: #{tpu_custom_call.1} parent=0 // pred_region
    _
  $region17: #{tpu_custom_call.1} parent=0 // pred_fallthru
    _
  // Predicated region
  $region18: #{tpu_custom_call.1} parent=0 // pred_check
    _
  $region19: #{tpu_custom_call.1} parent=0 // pred_check_branch
    %21 = sbr.rel (0) target = $region21
  $region20: #{tpu_custom_call.1} parent=0 // pred_region
    _
  $region21: #{tpu_custom_call.1} parent=0 // pred_fallthru
    _
  // Predicated region
  $region22: #{tpu_custom_call.1} parent=0 // pred_check
    _
  $region23: #{tpu_custom_call.1} parent=0 // pred_check_branch
    %23 = sbr.rel (0) target = $region25
  $region24: #{tpu_custom_call.1} parent=0 // pred_region
    _
  $region25: #{tpu_custom_call.1} parent=0 // pred_fallthru
    _
  // Predicated region
  $region26: #{tpu_custom_call.1} parent=0 // pred_check
    _
  $region27: #{tpu_custom_call.1} parent=0 // pred_check_branch
    %25 = sbr.rel (0) target = $region29
  $region28: #{tpu_custom_call.1} parent=0 // pred_region
    _
  $region29: #{tpu_custom_call.1} parent=0 // pred_fallthru
    _
  %v26 = vld [vmem:[%s0] sm:$0xff]
  %v27 = vld [vmem:[%s0 + $0x8] sm:$0xff]
  %v28 = vld [vmem:[%s0 + $0x10] sm:$0xff]
  %v29 = vld [vmem:[%s0 + $0x18] sm:$0xff]
  %v30 = vld [vmem:[%s0 + $0x20] sm:$0xff]
  %v31 = vld [vmem:[%s0 + $0x28] sm:$0xff]
  %v32 = vld [vmem:[%s0 + $0x30] sm:$0xff]
  %v33 = vld [vmem:[%s0 + $0x38] sm:$0xff]
  %v34 = vld [vmem:[%s0 + $0x40] sm:$0xff]
  %v35 = vld [vmem:[%s0 + $0x48] sm:$0xff]
  %v36 = vld [vmem:[%s0 + $0x50] sm:$0xff]
  %v37 = vld [vmem:[%s0 + $0x58] sm:$0xff]
  %v38 = vld [vmem:[%s0 + $0x60] sm:$0xff]
  %v39 = vld [vmem:[%s0 + $0x68] sm:$0xff]
  %v40 = vld [vmem:[%s0 + $0x70] sm:$0xff]
  %v41 = vld [vmem:[%s0 + $0x78] sm:$0xff]
  %v42 = vld [vmem:[%s0 + $0x80] sm:$0xff]
  %v43 = vld [vmem:[%s0 + $0x88] sm:$0xff]
  %v44 = vld [vmem:[%s0 + $0x90] sm:$0xff]
  %v45 = vld [vmem:[%s0 + $0x98] sm:$0xff]
  %v46 = vld [vmem:[%s0 + $0xa0] sm:$0xff]
  %v47 = vld [vmem:[%s0 + $0xa8] sm:$0xff]
  %v48 = vld [vmem:[%s0 + $0xb0] sm:$0xff]
  %v49 = vld [vmem:[%s0 + $0xb8] sm:$0xff]
  %v50 = vld [vmem:[%s0 + $0xc0] sm:$0xff]
  %v51 = vld [vmem:[%s0 + $0xc8] sm:$0xff]
  %v52 = vld [vmem:[%s0 + $0xd0] sm:$0xff]
  %v53 = vld [vmem:[%s0 + $0xd8] sm:$0xff]
  %v54 = vld [vmem:[%s0 + $0xe0] sm:$0xff]
  %v55 = vld [vmem:[%s0 + $0xe8] sm:$0xff]
  %v56 = vld [vmem:[%s0 + $0xf0] sm:$0xff]
  %v57 = vld [vmem:[%s0 + $0xf8] sm:$0xff]
  %v58 = vld [vmem:[%s1] sm:$0xff]
  %v59 = vld [vmem:[%s1 + $0x8] sm:$0xff]
  %v60 = vld [vmem:[%s1 + $0x10] sm:$0xff]
  %v61 = vld [vmem:[%s1 + $0x18] sm:$0xff]
  %v62 = vld [vmem:[%s2] sm:$0x1]
  %v64 = vlaneseq
  %v65 = vshrl.u32 %v64, 7
  %v66 = vsub.s32 0, %v65
  %v67 = vrot.slane %v62, %v66
  %vm69 = vcmask 261120
  %v71 = vsel %vm69, %v26, 0
  %v74 = vsel %vm69, %v27, 0
  %v77 = vsel %vm69, %v28, 0
  %v80 = vsel %vm69, %v29, 0
  %v83 = vsel %vm69, %v30, 0
  %v86 = vsel %vm69, %v31, 0
  %v89 = vsel %vm69, %v32, 0
  %v92 = vsel %vm69, %v33, 0
  %v95 = vsel %vm69, %v34, 0
  %v98 = vsel %vm69, %v35, 0
  %v101 = vsel %vm69, %v36, 0
  %v104 = vsel %vm69, %v37, 0
  %v107 = vsel %vm69, %v38, 0
  %v110 = vsel %vm69, %v39, 0
  %v113 = vsel %vm69, %v40, 0
  %v116 = vsel %vm69, %v41, 0
  %v119 = vsel %vm69, %v42, 0
  %v122 = vsel %vm69, %v43, 0
  %v125 = vsel %vm69, %v44, 0
  %v128 = vsel %vm69, %v45, 0
  %v131 = vsel %vm69, %v46, 0
  %v134 = vsel %vm69, %v47, 0
  %v137 = vsel %vm69, %v48, 0
  %v140 = vsel %vm69, %v49, 0
  %v143 = vsel %vm69, %v50, 0
  %v146 = vsel %vm69, %v51, 0
  %v149 = vsel %vm69, %v52, 0
  %v152 = vsel %vm69, %v53, 0
  %v155 = vsel %vm69, %v54, 0
  %v158 = vsel %vm69, %v55, 0
  %v161 = vsel %vm69, %v56, 0
  %v164 = vsel %vm69, %v57, 0
  %166 = vmatprep.subr.mxu0 0.0
  %167 = vmatpush1.msra.mxu0 %v58
  %168 = vmatprep.subr.mxu0 0.0
  %169 = vmatpush1.msra.mxu0 %v59
  %170 = vmatprep.subr.mxu0 0.0
  %171 = vmatpush1.msra.mxu0 %v60
  %172 = vmatprep.subr.mxu0 0.0
  %173 = vmatpush1.msra.mxu0 %v61
  %174 = vmatprep.subr.mxu0 0.0
  %175 = vmatpush1.msra.mxu0 0.0
  %176 = vmatprep.subr.mxu0 0.0
  %177 = vmatpush1.msra.mxu0 0.0
  %178 = vmatprep.subr.mxu0 0.0
  %179 = vmatpush1.msra.mxu0 0.0
  %180 = vmatprep.subr.mxu0 0.0
  %181 = vmatpush1.msra.mxu0 0.0
  %182 = vmatprep.subr.mxu0 0.0
  %183 = vmatpush1.msra.mxu0 0.0
  %184 = vmatprep.subr.mxu0 0.0
  %185 = vmatpush1.msra.mxu0 0.0
  %186 = vmatprep.subr.mxu0 0.0
  %187 = vmatpush1.msra.mxu0 0.0
  %188 = vmatprep.subr.mxu0 0.0
  %189 = vmatpush1.msra.mxu0 0.0
  %190 = vmatprep.subr.mxu0 0.0
  %191 = vmatpush1.msra.mxu0 0.0
  %192 = vmatprep.subr.mxu0 0.0
  %193 = vmatpush1.msra.mxu0 0.0
  %194 = vmatprep.subr.mxu0 0.0
  %195 = vmatpush1.msra.mxu0 0.0
  %196 = vmatprep.subr.mxu0 0.0
  %197 = vmatpush1.msra.mxu0 0.0
  %198 = vmatprep.subr.mxu0 0.0
  %199 = vmatpush1.msra.mxu0 0.0
  %200 = vmatprep.subr.mxu0 0.0
  %201 = vmatpush1.msra.mxu0 0.0
  %202 = vmatprep.subr.mxu0 0.0
  %203 = vmatpush1.msra.mxu0 0.0
  %204 = vmatprep.subr.mxu0 0.0
  %205 = vmatpush1.msra.mxu0 0.0
  %206 = vmatprep.subr.mxu0 0.0
  %207 = vmatpush1.msra.mxu0 0.0
  %208 = vmatprep.subr.mxu0 0.0
  %209 = vmatpush1.msra.mxu0 0.0
  %210 = vmatprep.subr.mxu0 0.0
  %211 = vmatpush1.msra.mxu0 0.0
  %212 = vmatprep.subr.mxu0 0.0
  %213 = vmatpush1.msra.mxu0 0.0
  %214 = vmatprep.subr.mxu0 0.0
  %215 = vmatpush1.msra.mxu0 0.0
  %216 = vmatprep.subr.mxu0 0.0
  %217 = vmatpush1.msra.mxu0 0.0
  %218 = vmatprep.subr.mxu0 0.0
  %219 = vmatpush1.msra.mxu0 0.0
  %220 = vmatprep.subr.mxu0 0.0
  %221 = vmatpush1.msra.mxu0 0.0
  %222 = vmatprep.subr.mxu0 0.0
  %223 = vmatpush1.msra.mxu0 0.0
  %224 = vmatprep.subr.mxu0 0.0
  %225 = vmatpush1.msra.mxu0 0.0
  %226 = vmatprep.subr.mxu0 0.0
  %227 = vmatpush1.msra.mxu0 0.0
  %228 = vmatprep.subr.mxu0 0.0
  %229 = vmatpush1.msra.mxu0 0.0
  %230 = vmatprep.mubr.f32.mxu0 0.0
  %231 = vmatmul.mubr.f32.gmra.mrb[0].mxu0 %v71
  %v232 = vpop.f32.mrb[0].mxu0
  %v233 = vadd.f32 %v67, %v232
  %v234 = vpop.f32.mrb[0].mxu0
  %235 = vmatprep.mubr.f32.mxu0 0.0
  %236 = vmatmul.mubr.f32.gmra.mrb[0].mxu0 %v74
  %v237 = vpop.f32.mrb[0].mxu0
  %v238 = vadd.f32 %v67, %v237
  %v239 = vpop.f32.mrb[0].mxu0
  %240 = vmatprep.mubr.f32.mxu0 0.0
  %241 = vmatmul.mubr.f32.gmra.mrb[0].mxu0 %v77
  %v242 = vpop.f32.mrb[0].mxu0
  %v243 = vadd.f32 %v67, %v242
  %v244 = vpop.f32.mrb[0].mxu0
  %245 = vmatprep.mubr.f32.mxu0 0.0
  %246 = vmatmul.mubr.f32.gmra.mrb[0].mxu0 %v80
  %v247 = vpop.f32.mrb[0].mxu0
  %v248 = vadd.f32 %v67, %v247
  %v249 = vpop.f32.mrb[0].mxu0
  %250 = vmatprep.mubr.f32.mxu0 0.0
  %251 = vmatmul.mubr.f32.gmra.mrb[0].mxu0 %v83
  %v252 = vpop.f32.mrb[0].mxu0
  %v253 = vadd.f32 %v67, %v252
  %v254 = vpop.f32.mrb[0].mxu0
  %255 = vmatprep.mubr.f32.mxu0 0.0
  %256 = vmatmul.mubr.f32.gmra.mrb[0].mxu0 %v86
  %v257 = vpop.f32.mrb[0].mxu0
  %v258 = vadd.f32 %v67, %v257
  %v259 = vpop.f32.mrb[0].mxu0
  %260 = vmatprep.mubr.f32.mxu0 0.0
  %261 = vmatmul.mubr.f32.gmra.mrb[0].mxu0 %v89
  %v262 = vpop.f32.mrb[0].mxu0
  %v263 = vadd.f32 %v67, %v262
  %v264 = vpop.f32.mrb[0].mxu0
  %265 = vmatprep.mubr.f32.mxu0 0.0
  %266 = vmatmul.mubr.f32.gmra.mrb[0].mxu0 %v92
  %v267 = vpop.f32.mrb[0].mxu0
  %v268 = vadd.f32 %v67, %v267
  %v269 = vpop.f32.mrb[0].mxu0
  %270 = vmatprep.mubr.f32.mxu0 0.0
  %271 = vmatmul.mubr.f32.gmra.mrb[0].mxu0 %v95
  %v272 = vpop.f32.mrb[0].mxu0
  %v273 = vadd.f32 %v67, %v272
  %v274 = vpop.f32.mrb[0].mxu0
  %275 = vmatprep.mubr.f32.mxu0 0.0
  %276 = vmatmul.mubr.f32.gmra.mrb[0].mxu0 %v98
  %v277 = vpop.f32.mrb[0].mxu0
  %v278 = vadd.f32 %v67, %v277
  %v279 = vpop.f32.mrb[0].mxu0
  %280 = vmatprep.mubr.f32.mxu0 0.0
  %281 = vmatmul.mubr.f32.gmra.mrb[0].mxu0 %v101
  %v282 = vpop.f32.mrb[0].mxu0
  %v283 = vadd.f32 %v67, %v282
  %v284 = vpop.f32.mrb[0].mxu0
  %285 = vmatprep.mubr.f32.mxu0 0.0
  %286 = vmatmul.mubr.f32.gmra.mrb[0].mxu0 %v104
  %v287 = vpop.f32.mrb[0].mxu0
  %v288 = vadd.f32 %v67, %v287
  %v289 = vpop.f32.mrb[0].mxu0
  %290 = vmatprep.mubr.f32.mxu0 0.0
  %291 = vmatmul.mubr.f32.gmra.mrb[0].mxu0 %v107
  %v292 = vpop.f32.mrb[0].mxu0
  %v293 = vadd.f32 %v67, %v292
  %v294 = vpop.f32.mrb[0].mxu0
  %295 = vmatprep.mubr.f32.mxu0 0.0
  %296 = vmatmul.mubr.f32.gmra.mrb[0].mxu0 %v110
  %v297 = vpop.f32.mrb[0].mxu0
  %v298 = vadd.f32 %v67, %v297
  %v299 = vpop.f32.mrb[0].mxu0
  %300 = vmatprep.mubr.f32.mxu0 0.0
  %301 = vmatmul.mubr.f32.gmra.mrb[0].mxu0 %v113
  %v302 = vpop.f32.mrb[0].mxu0
  %v303 = vadd.f32 %v67, %v302
  %v304 = vpop.f32.mrb[0].mxu0
  %305 = vmatprep.mubr.f32.mxu0 0.0
  %306 = vmatmul.mubr.f32.gmra.mrb[0].mxu0 %v116
  %v307 = vpop.f32.mrb[0].mxu0
  %v308 = vadd.f32 %v67, %v307
  %v309 = vpop.f32.mrb[0].mxu0
  %310 = vmatprep.mubr.f32.mxu0 0.0
  %311 = vmatmul.mubr.f32.gmra.mrb[0].mxu0 %v119
  %v312 = vpop.f32.mrb[0].mxu0
  %v313 = vadd.f32 %v67, %v312
  %v314 = vpop.f32.mrb[0].mxu0
  %315 = vmatprep.mubr.f32.mxu0 0.0
  %316 = vmatmul.mubr.f32.gmra.mrb[0].mxu0 %v122
  %v317 = vpop.f32.mrb[0].mxu0
  %v318 = vadd.f32 %v67, %v317
  %v319 = vpop.f32.mrb[0].mxu0
  %320 = vmatprep.mubr.f32.mxu0 0.0
  %321 = vmatmul.mubr.f32.gmra.mrb[0].mxu0 %v125
  %v322 = vpop.f32.mrb[0].mxu0
  %v323 = vadd.f32 %v67, %v322
  %v324 = vpop.f32.mrb[0].mxu0
  %325 = vmatprep.mubr.f32.mxu0 0.0
  %326 = vmatmul.mubr.f32.gmra.mrb[0].mxu0 %v128
  %v327 = vpop.f32.mrb[0].mxu0
  %v328 = vadd.f32 %v67, %v327
  %v329 = vpop.f32.mrb[0].mxu0
  %330 = vmatprep.mubr.f32.mxu0 0.0
  %331 = vmatmul.mubr.f32.gmra.mrb[0].mxu0 %v131
  %v332 = vpop.f32.mrb[0].mxu0
  %v333 = vadd.f32 %v67, %v332
  %v334 = vpop.f32.mrb[0].mxu0
  %335 = vmatprep.mubr.f32.mxu0 0.0
  %336 = vmatmul.mubr.f32.gmra.mrb[0].mxu0 %v134
  %v337 = vpop.f32.mrb[0].mxu0
  %v338 = vadd.f32 %v67, %v337
  %v339 = vpop.f32.mrb[0].mxu0
  %340 = vmatprep.mubr.f32.mxu0 0.0
  %341 = vmatmul.mubr.f32.gmra.mrb[0].mxu0 %v137
  %v342 = vpop.f32.mrb[0].mxu0
  %v343 = vadd.f32 %v67, %v342
  %v344 = vpop.f32.mrb[0].mxu0
  %345 = vmatprep.mubr.f32.mxu0 0.0
  %346 = vmatmul.mubr.f32.gmra.mrb[0].mxu0 %v140
  %v347 = vpop.f32.mrb[0].mxu0
  %v348 = vadd.f32 %v67, %v347
  %v349 = vpop.f32.mrb[0].mxu0
  %350 = vmatprep.mubr.f32.mxu0 0.0
  %351 = vmatmul.mubr.f32.gmra.mrb[0].mxu0 %v143
  %v352 = vpop.f32.mrb[0].mxu0
  %v353 = vadd.f32 %v67, %v352
  %v354 = vpop.f32.mrb[0].mxu0
  %355 = vmatprep.mubr.f32.mxu0 0.0
  %356 = vmatmul.mubr.f32.gmra.mrb[0].mxu0 %v146
  %v357 = vpop.f32.mrb[0].mxu0
  %v358 = vadd.f32 %v67, %v357
  %v359 = vpop.f32.mrb[0].mxu0
  %360 = vmatprep.mubr.f32.mxu0 0.0
  %361 = vmatmul.mubr.f32.gmra.mrb[0].mxu0 %v149
  %v362 = vpop.f32.mrb[0].mxu0
  %v363 = vadd.f32 %v67, %v362
  %v364 = vpop.f32.mrb[0].mxu0
  %365 = vmatprep.mubr.f32.mxu0 0.0
  %366 = vmatmul.mubr.f32.gmra.mrb[0].mxu0 %v152
  %v367 = vpop.f32.mrb[0].mxu0
  %v368 = vadd.f32 %v67, %v367
  %v369 = vpop.f32.mrb[0].mxu0
  %370 = vmatprep.mubr.f32.mxu0 0.0
  %371 = vmatmul.mubr.f32.gmra.mrb[0].mxu0 %v155
  %v372 = vpop.f32.mrb[0].mxu0
  %v373 = vadd.f32 %v67, %v372
  %v374 = vpop.f32.mrb[0].mxu0
  %375 = vmatprep.mubr.f32.mxu0 0.0
  %376 = vmatmul.mubr.f32.gmra.mrb[0].mxu0 %v158
  %v377 = vpop.f32.mrb[0].mxu0
  %v378 = vadd.f32 %v67, %v377
  %v379 = vpop.f32.mrb[0].mxu0
  %380 = vmatprep.mubr.f32.mxu0 0.0
  %381 = vmatmul.mubr.f32.gmra.mrb[0].mxu0 %v161
  %v382 = vpop.f32.mrb[0].mxu0
  %v383 = vadd.f32 %v67, %v382
  %v384 = vpop.f32.mrb[0].mxu0
  %385 = vmatprep.mubr.f32.mxu0 0.0
  %386 = vmatmul.mubr.f32.gmra.mrb[0].mxu0 %v164
  %v387 = vpop.f32.mrb[0].mxu0
  %v388 = vadd.f32 %v67, %v387
  %v389 = vpop.f32.mrb[0].mxu0
  %390 = vdwg.mxu0
  %v391 = vmax.f32 %v233, 0.0
  %v392 = vmax.f32 %v238, 0.0
  %v393 = vmax.f32 %v243, 0.0
  %v394 = vmax.f32 %v248, 0.0
  %v395 = vmax.f32 %v253, 0.0
  %v396 = vmax.f32 %v258, 0.0
  %v397 = vmax.f32 %v263, 0.0
  %v398 = vmax.f32 %v268, 0.0
  %v399 = vmax.f32 %v273, 0.0
  %v400 = vmax.f32 %v278, 0.0
  %v401 = vmax.f32 %v283, 0.0
  %v402 = vmax.f32 %v288, 0.0
  %v403 = vmax.f32 %v293, 0.0
  %v404 = vmax.f32 %v298, 0.0
  %v405 = vmax.f32 %v303, 0.0
  %v406 = vmax.f32 %v308, 0.0
  %v407 = vmax.f32 %v313, 0.0
  %v408 = vmax.f32 %v318, 0.0
  %v409 = vmax.f32 %v323, 0.0
  %v410 = vmax.f32 %v328, 0.0
  %v411 = vmax.f32 %v333, 0.0
  %v412 = vmax.f32 %v338, 0.0
  %v413 = vmax.f32 %v343, 0.0
  %v414 = vmax.f32 %v348, 0.0
  %v415 = vmax.f32 %v353, 0.0
  %v416 = vmax.f32 %v358, 0.0
  %v417 = vmax.f32 %v363, 0.0
  %v418 = vmax.f32 %v368, 0.0
  %v419 = vmax.f32 %v373, 0.0
  %v420 = vmax.f32 %v378, 0.0
  %v421 = vmax.f32 %v383, 0.0
  %v422 = vmax.f32 %v388, 0.0
  %v423 = vld [vmem:[%s3] sm:$0xff]
  %v424 = vld [vmem:[%s3 + $0x8] sm:$0xff]
  %v425 = vld [vmem:[%s3 + $0x10] sm:$0xff]
  %v426 = vld [vmem:[%s3 + $0x18] sm:$0xff]
  %v427 = vld [vmem:[%s3 + $0x20] sm:$0xff]
  %v428 = vld [vmem:[%s3 + $0x28] sm:$0xff]
  %v429 = vld [vmem:[%s3 + $0x30] sm:$0xff]
  %v430 = vld [vmem:[%s3 + $0x38] sm:$0xff]
  %v431 = vld [vmem:[%s3 + $0x40] sm:$0xff]
  %v432 = vld [vmem:[%s3 + $0x48] sm:$0xff]
  %v433 = vld [vmem:[%s3 + $0x50] sm:$0xff]
  %v434 = vld [vmem:[%s3 + $0x58] sm:$0xff]
  %v435 = vld [vmem:[%s3 + $0x60] sm:$0xff]
  %v436 = vld [vmem:[%s3 + $0x68] sm:$0xff]
  %v437 = vld [vmem:[%s3 + $0x70] sm:$0xff]
  %v438 = vld [vmem:[%s3 + $0x78] sm:$0xff]
  %v439 = vld [vmem:[%s4] sm:$0x1]
  %v441 = vlaneseq
  %v442 = vshrl.u32 %v441, 7
  %v443 = vsub.s32 0, %v442
  %v444 = vrot.slane %v439, %v443
  %446 = vmatprep.subr.mxu0 0.0
  %447 = vmatpush1.msra.mxu0 %v423
  %448 = vmatprep.subr.mxu0 0.0
  %449 = vmatpush1.msra.mxu0 %v424
  %450 = vmatprep.subr.mxu0 0.0
  %451 = vmatpush1.msra.mxu0 %v425
  %452 = vmatprep.subr.mxu0 0.0
  %453 = vmatpush1.msra.mxu0 %v426
  %454 = vmatprep.subr.mxu0 0.0
  %455 = vmatpush1.msra.mxu0 %v427
  %456 = vmatprep.subr.mxu0 0.0
  %457 = vmatpush1.msra.mxu0 %v428
  %458 = vmatprep.subr.mxu0 0.0
  %459 = vmatpush1.msra.mxu0 %v429
  %460 = vmatprep.subr.mxu0 0.0
  %461 = vmatpush1.msra.mxu0 %v430
  %462 = vmatprep.subr.mxu0 0.0
  %463 = vmatpush1.msra.mxu0 %v431
  %464 = vmatprep.subr.mxu0 0.0
  %465 = vmatpush1.msra.mxu0 %v432
  %466 = vmatprep.subr.mxu0 0.0
  %467 = vmatpush1.msra.mxu0 %v433
  %468 = vmatprep.subr.mxu0 0.0
  %469 = vmatpush1.msra.mxu0 %v434
  %470 = vmatprep.subr.mxu0 0.0
  %471 = vmatpush1.msra.mxu0 %v435
  %472 = vmatprep.subr.mxu0 0.0
  %473 = vmatpush1.msra.mxu0 %v436
  %474 = vmatprep.subr.mxu0 0.0
  %475 = vmatpush1.msra.mxu0 %v437
  %476 = vmatprep.subr.mxu0 0.0
  %477 = vmatpush1.msra.mxu0 %v438
  %478 = vmatprep.subr.mxu0 0.0
  %479 = vmatpush1.msra.mxu0 0.0
  %480 = vmatprep.subr.mxu0 0.0
  %481 = vmatpush1.msra.mxu0 0.0
  %482 = vmatprep.subr.mxu0 0.0
  %483 = vmatpush1.msra.mxu0 0.0
  %484 = vmatprep.subr.mxu0 0.0
  %485 = vmatpush1.msra.mxu0 0.0
  %486 = vmatprep.subr.mxu0 0.0
  %487 = vmatpush1.msra.mxu0 0.0
  %488 = vmatprep.subr.mxu0 0.0
  %489 = vmatpush1.msra.mxu0 0.0
  %490 = vmatprep.subr.mxu0 0.0
  %491 = vmatpush1.msra.mxu0 0.0
  %492 = vmatprep.subr.mxu0 0.0
  %493 = vmatpush1.msra.mxu0 0.0
  %494 = vmatprep.subr.mxu0 0.0
  %495 = vmatpush1.msra.mxu0 0.0
  %496 = vmatprep.subr.mxu0 0.0
  %497 = vmatpush1.msra.mxu0 0.0
  %498 = vmatprep.subr.mxu0 0.0
  %499 = vmatpush1.msra.mxu0 0.0
  %500 = vmatprep.subr.mxu0 0.0
  %501 = vmatpush1.msra.mxu0 0.0
  %502 = vmatprep.subr.mxu0 0.0
  %503 = vmatpush1.msra.mxu0 0.0
  %504 = vmatprep.subr.mxu0 0.0
  %505 = vmatpush1.msra.mxu0 0.0
  %506 = vmatprep.subr.mxu0 0.0
  %507 = vmatpush1.msra.mxu0 0.0
  %508 = vmatprep.subr.mxu0 0.0
  %509 = vmatpush1.msra.mxu0 0.0
  %510 = vmatprep.mubr.f32.mxu0 0.0
  %511 = vmatmul.mubr.f32.gmra.mrb[0].mxu0 %v391
  %v512 = vpop.f32.mrb[0].mxu0
  %v513 = vadd.f32 %v444, %v512
  %v514 = vpop.f32.mrb[0].mxu0
  %515 = vmatprep.mubr.f32.mxu0 0.0
  %516 = vmatmul.mubr.f32.gmra.mrb[0].mxu0 %v392
  %v517 = vpop.f32.mrb[0].mxu0
  %v518 = vadd.f32 %v444, %v517
  %v519 = vpop.f32.mrb[0].mxu0
  %520 = vmatprep.mubr.f32.mxu0 0.0
  %521 = vmatmul.mubr.f32.gmra.mrb[0].mxu0 %v393
  %v522 = vpop.f32.mrb[0].mxu0
  %v523 = vadd.f32 %v444, %v522
  %v524 = vpop.f32.mrb[0].mxu0
  %525 = vmatprep.mubr.f32.mxu0 0.0
  %526 = vmatmul.mubr.f32.gmra.mrb[0].mxu0 %v394
  %v527 = vpop.f32.mrb[0].mxu0
  %v528 = vadd.f32 %v444, %v527
  %v529 = vpop.f32.mrb[0].mxu0
  %530 = vmatprep.mubr.f32.mxu0 0.0
  %531 = vmatmul.mubr.f32.gmra.mrb[0].mxu0 %v395
  %v532 = vpop.f32.mrb[0].mxu0
  %v533 = vadd.f32 %v444, %v532
  %v534 = vpop.f32.mrb[0].mxu0
  %535 = vmatprep.mubr.f32.mxu0 0.0
  %536 = vmatmul.mubr.f32.gmra.mrb[0].mxu0 %v396
  %v537 = vpop.f32.mrb[0].mxu0
  %v538 = vadd.f32 %v444, %v537
  %v539 = vpop.f32.mrb[0].mxu0
  %540 = vmatprep.mubr.f32.mxu0 0.0
  %541 = vmatmul.mubr.f32.gmra.mrb[0].mxu0 %v397
  %v542 = vpop.f32.mrb[0].mxu0
  %v543 = vadd.f32 %v444, %v542
  %v544 = vpop.f32.mrb[0].mxu0
  %545 = vmatprep.mubr.f32.mxu0 0.0
  %546 = vmatmul.mubr.f32.gmra.mrb[0].mxu0 %v398
  %v547 = vpop.f32.mrb[0].mxu0
  %v548 = vadd.f32 %v444, %v547
  %v549 = vpop.f32.mrb[0].mxu0
  %550 = vmatprep.mubr.f32.mxu0 0.0
  %551 = vmatmul.mubr.f32.gmra.mrb[0].mxu0 %v399
  %v552 = vpop.f32.mrb[0].mxu0
  %v553 = vadd.f32 %v444, %v552
  %v554 = vpop.f32.mrb[0].mxu0
  %555 = vmatprep.mubr.f32.mxu0 0.0
  %556 = vmatmul.mubr.f32.gmra.mrb[0].mxu0 %v400
  %v557 = vpop.f32.mrb[0].mxu0
  %v558 = vadd.f32 %v444, %v557
  %v559 = vpop.f32.mrb[0].mxu0
  %560 = vmatprep.mubr.f32.mxu0 0.0
  %561 = vmatmul.mubr.f32.gmra.mrb[0].mxu0 %v401
  %v562 = vpop.f32.mrb[0].mxu0
  %v563 = vadd.f32 %v444, %v562
  %v564 = vpop.f32.mrb[0].mxu0
  %565 = vmatprep.mubr.f32.mxu0 0.0
  %566 = vmatmul.mubr.f32.gmra.mrb[0].mxu0 %v402
  %v567 = vpop.f32.mrb[0].mxu0
  %v568 = vadd.f32 %v444, %v567
  %v569 = vpop.f32.mrb[0].mxu0
  %570 = vmatprep.mubr.f32.mxu0 0.0
  %571 = vmatmul.mubr.f32.gmra.mrb[0].mxu0 %v403
  %v572 = vpop.f32.mrb[0].mxu0
  %v573 = vadd.f32 %v444, %v572
  %v574 = vpop.f32.mrb[0].mxu0
  %575 = vmatprep.mubr.f32.mxu0 0.0
  %576 = vmatmul.mubr.f32.gmra.mrb[0].mxu0 %v404
  %v577 = vpop.f32.mrb[0].mxu0
  %v578 = vadd.f32 %v444, %v577
  %v579 = vpop.f32.mrb[0].mxu0
  %580 = vmatprep.mubr.f32.mxu0 0.0
  %581 = vmatmul.mubr.f32.gmra.mrb[0].mxu0 %v405
  %v582 = vpop.f32.mrb[0].mxu0
  %v583 = vadd.f32 %v444, %v582
  %v584 = vpop.f32.mrb[0].mxu0
  %585 = vmatprep.mubr.f32.mxu0 0.0
  %586 = vmatmul.mubr.f32.gmra.mrb[0].mxu0 %v406
  %v587 = vpop.f32.mrb[0].mxu0
  %v588 = vadd.f32 %v444, %v587
  %v589 = vpop.f32.mrb[0].mxu0
  %590 = vmatprep.mubr.f32.mxu0 0.0
  %591 = vmatmul.mubr.f32.gmra.mrb[0].mxu0 %v407
  %v592 = vpop.f32.mrb[0].mxu0
  %v593 = vadd.f32 %v444, %v592
  %v594 = vpop.f32.mrb[0].mxu0
  %595 = vmatprep.mubr.f32.mxu0 0.0
  %596 = vmatmul.mubr.f32.gmra.mrb[0].mxu0 %v408
  %v597 = vpop.f32.mrb[0].mxu0
  %v598 = vadd.f32 %v444, %v597
  %v599 = vpop.f32.mrb[0].mxu0
  %600 = vmatprep.mubr.f32.mxu0 0.0
  %601 = vmatmul.mubr.f32.gmra.mrb[0].mxu0 %v409
  %v602 = vpop.f32.mrb[0].mxu0
  %v603 = vadd.f32 %v444, %v602
  %v604 = vpop.f32.mrb[0].mxu0
  %605 = vmatprep.mubr.f32.mxu0 0.0
  %606 = vmatmul.mubr.f32.gmra.mrb[0].mxu0 %v410
  %v607 = vpop.f32.mrb[0].mxu0
  %v608 = vadd.f32 %v444, %v607
  %v609 = vpop.f32.mrb[0].mxu0
  %610 = vmatprep.mubr.f32.mxu0 0.0
  %611 = vmatmul.mubr.f32.gmra.mrb[0].mxu0 %v411
  %v612 = vpop.f32.mrb[0].mxu0
  %v613 = vadd.f32 %v444, %v612
  %v614 = vpop.f32.mrb[0].mxu0
  %615 = vmatprep.mubr.f32.mxu0 0.0
  %616 = vmatmul.mubr.f32.gmra.mrb[0].mxu0 %v412
  %v617 = vpop.f32.mrb[0].mxu0
  %v618 = vadd.f32 %v444, %v617
  %v619 = vpop.f32.mrb[0].mxu0
  %620 = vmatprep.mubr.f32.mxu0 0.0
  %621 = vmatmul.mubr.f32.gmra.mrb[0].mxu0 %v413
  %v622 = vpop.f32.mrb[0].mxu0
  %v623 = vadd.f32 %v444, %v622
  %v624 = vpop.f32.mrb[0].mxu0
  %625 = vmatprep.mubr.f32.mxu0 0.0
  %626 = vmatmul.mubr.f32.gmra.mrb[0].mxu0 %v414
  %v627 = vpop.f32.mrb[0].mxu0
  %v628 = vadd.f32 %v444, %v627
  %v629 = vpop.f32.mrb[0].mxu0
  %630 = vmatprep.mubr.f32.mxu0 0.0
  %631 = vmatmul.mubr.f32.gmra.mrb[0].mxu0 %v415
  %v632 = vpop.f32.mrb[0].mxu0
  %v633 = vadd.f32 %v444, %v632
  %v634 = vpop.f32.mrb[0].mxu0
  %635 = vmatprep.mubr.f32.mxu0 0.0
  %636 = vmatmul.mubr.f32.gmra.mrb[0].mxu0 %v416
  %v637 = vpop.f32.mrb[0].mxu0
  %v638 = vadd.f32 %v444, %v637
  %v639 = vpop.f32.mrb[0].mxu0
  %640 = vmatprep.mubr.f32.mxu0 0.0
  %641 = vmatmul.mubr.f32.gmra.mrb[0].mxu0 %v417
  %v642 = vpop.f32.mrb[0].mxu0
  %v643 = vadd.f32 %v444, %v642
  %v644 = vpop.f32.mrb[0].mxu0
  %645 = vmatprep.mubr.f32.mxu0 0.0
  %646 = vmatmul.mubr.f32.gmra.mrb[0].mxu0 %v418
  %v647 = vpop.f32.mrb[0].mxu0
  %v648 = vadd.f32 %v444, %v647
  %v649 = vpop.f32.mrb[0].mxu0
  %650 = vmatprep.mubr.f32.mxu0 0.0
  %651 = vmatmul.mubr.f32.gmra.mrb[0].mxu0 %v419
  %v652 = vpop.f32.mrb[0].mxu0
  %v653 = vadd.f32 %v444, %v652
  %v654 = vpop.f32.mrb[0].mxu0
  %655 = vmatprep.mubr.f32.mxu0 0.0
  %656 = vmatmul.mubr.f32.gmra.mrb[0].mxu0 %v420
  %v657 = vpop.f32.mrb[0].mxu0
  %v658 = vadd.f32 %v444, %v657
  %v659 = vpop.f32.mrb[0].mxu0
  %660 = vmatprep.mubr.f32.mxu0 0.0
  %661 = vmatmul.mubr.f32.gmra.mrb[0].mxu0 %v421
  %v662 = vpop.f32.mrb[0].mxu0
  %v663 = vadd.f32 %v444, %v662
  %v664 = vpop.f32.mrb[0].mxu0
  %665 = vmatprep.mubr.f32.mxu0 0.0
  %666 = vmatmul.mubr.f32.gmra.mrb[0].mxu0 %v422
  %v667 = vpop.f32.mrb[0].mxu0
  %v668 = vadd.f32 %v444, %v667
  %v669 = vpop.f32.mrb[0].mxu0
  %670 = vdwg.mxu0
  %v671 = vmax.f32 %v513, 0.0
  %v672 = vmax.f32 %v518, 0.0
  %v673 = vmax.f32 %v523, 0.0
  %v674 = vmax.f32 %v528, 0.0
  %v675 = vmax.f32 %v533, 0.0
  %v676 = vmax.f32 %v538, 0.0
  %v677 = vmax.f32 %v543, 0.0
  %v678 = vmax.f32 %v548, 0.0
  %v679 = vmax.f32 %v553, 0.0
  %v680 = vmax.f32 %v558, 0.0
  %v681 = vmax.f32 %v563, 0.0
  %v682 = vmax.f32 %v568, 0.0
  %v683 = vmax.f32 %v573, 0.0
  %v684 = vmax.f32 %v578, 0.0
  %v685 = vmax.f32 %v583, 0.0
  %v686 = vmax.f32 %v588, 0.0
  %v687 = vmax.f32 %v593, 0.0
  %v688 = vmax.f32 %v598, 0.0
  %v689 = vmax.f32 %v603, 0.0
  %v690 = vmax.f32 %v608, 0.0
  %v691 = vmax.f32 %v613, 0.0
  %v692 = vmax.f32 %v618, 0.0
  %v693 = vmax.f32 %v623, 0.0
  %v694 = vmax.f32 %v628, 0.0
  %v695 = vmax.f32 %v633, 0.0
  %v696 = vmax.f32 %v638, 0.0
  %v697 = vmax.f32 %v643, 0.0
  %v698 = vmax.f32 %v648, 0.0
  %v699 = vmax.f32 %v653, 0.0
  %v700 = vmax.f32 %v658, 0.0
  %v701 = vmax.f32 %v663, 0.0
  %v702 = vmax.f32 %v668, 0.0
  %v703 = vld [vmem:[%s5] sm:$0xff]
  %v704 = vld [vmem:[%s5 + $0x8] sm:$0xff]
  %v705 = vld [vmem:[%s5 + $0x10] sm:$0xff]
  %v706 = vld [vmem:[%s5 + $0x18] sm:$0xff]
  %v707 = vld [vmem:[%s5 + $0x20] sm:$0xff]
  %v708 = vld [vmem:[%s5 + $0x28] sm:$0xff]
  %v709 = vld [vmem:[%s5 + $0x30] sm:$0xff]
  %v710 = vld [vmem:[%s5 + $0x38] sm:$0xff]
  %v711 = vld [vmem:[%s5 + $0x40] sm:$0xff]
  %v712 = vld [vmem:[%s5 + $0x48] sm:$0xff]
  %v713 = vld [vmem:[%s5 + $0x50] sm:$0xff]
  %v714 = vld [vmem:[%s5 + $0x58] sm:$0xff]
  %v715 = vld [vmem:[%s5 + $0x60] sm:$0xff]
  %v716 = vld [vmem:[%s5 + $0x68] sm:$0xff]
  %v717 = vld [vmem:[%s5 + $0x70] sm:$0xff]
  %v718 = vld [vmem:[%s5 + $0x78] sm:$0xff]
  %v719 = vld [vmem:[%s6] sm:$0x1]
  %v721 = vlaneseq
  %v722 = vshrl.u32 %v721, 7
  %v723 = vsub.s32 0, %v722
  %v724 = vrot.slane %v719, %v723
  %726 = vmatprep.subr.mxu0 0.0
  %727 = vmatpush1.msra.mxu0 %v703
  %728 = vmatprep.subr.mxu0 0.0
  %729 = vmatpush1.msra.mxu0 %v704
  %730 = vmatprep.subr.mxu0 0.0
  %731 = vmatpush1.msra.mxu0 %v705
  %732 = vmatprep.subr.mxu0 0.0
  %733 = vmatpush1.msra.mxu0 %v706
  %734 = vmatprep.subr.mxu0 0.0
  %735 = vmatpush1.msra.mxu0 %v707
  %736 = vmatprep.subr.mxu0 0.0
  %737 = vmatpush1.msra.mxu0 %v708
  %738 = vmatprep.subr.mxu0 0.0
  %739 = vmatpush1.msra.mxu0 %v709
  %740 = vmatprep.subr.mxu0 0.0
  %741 = vmatpush1.msra.mxu0 %v710
  %742 = vmatprep.subr.mxu0 0.0
  %743 = vmatpush1.msra.mxu0 %v711
  %744 = vmatprep.subr.mxu0 0.0
  %745 = vmatpush1.msra.mxu0 %v712
  %746 = vmatprep.subr.mxu0 0.0
  %747 = vmatpush1.msra.mxu0 %v713
  %748 = vmatprep.subr.mxu0 0.0
  %749 = vmatpush1.msra.mxu0 %v714
  %750 = vmatprep.subr.mxu0 0.0
  %751 = vmatpush1.msra.mxu0 %v715
  %752 = vmatprep.subr.mxu0 0.0
  %753 = vmatpush1.msra.mxu0 %v716
  %754 = vmatprep.subr.mxu0 0.0
  %755 = vmatpush1.msra.mxu0 %v717
  %756 = vmatprep.subr.mxu0 0.0
  %757 = vmatpush1.msra.mxu0 %v718
  %758 = vmatprep.subr.mxu0 0.0
  %759 = vmatpush1.msra.mxu0 0.0
  %760 = vmatprep.subr.mxu0 0.0
  %761 = vmatpush1.msra.mxu0 0.0
  %762 = vmatprep.subr.mxu0 0.0
  %763 = vmatpush1.msra.mxu0 0.0
  %764 = vmatprep.subr.mxu0 0.0
  %765 = vmatpush1.msra.mxu0 0.0
  %766 = vmatprep.subr.mxu0 0.0
  %767 = vmatpush1.msra.mxu0 0.0
  %768 = vmatprep.subr.mxu0 0.0
  %769 = vmatpush1.msra.mxu0 0.0
  %770 = vmatprep.subr.mxu0 0.0
  %771 = vmatpush1.msra.mxu0 0.0
  %772 = vmatprep.subr.mxu0 0.0
  %773 = vmatpush1.msra.mxu0 0.0
  %774 = vmatprep.subr.mxu0 0.0
  %775 = vmatpush1.msra.mxu0 0.0
  %776 = vmatprep.subr.mxu0 0.0
  %777 = vmatpush1.msra.mxu0 0.0
  %778 = vmatprep.subr.mxu0 0.0
  %779 = vmatpush1.msra.mxu0 0.0
  %780 = vmatprep.subr.mxu0 0.0
  %781 = vmatpush1.msra.mxu0 0.0
  %782 = vmatprep.subr.mxu0 0.0
  %783 = vmatpush1.msra.mxu0 0.0
  %784 = vmatprep.subr.mxu0 0.0
  %785 = vmatpush1.msra.mxu0 0.0
  %786 = vmatprep.subr.mxu0 0.0
  %787 = vmatpush1.msra.mxu0 0.0
  %788 = vmatprep.subr.mxu0 0.0
  %789 = vmatpush1.msra.mxu0 0.0
  %790 = vmatprep.mubr.f32.mxu0 0.0
  %791 = vmatmul.mubr.f32.gmra.mrb[0].mxu0 %v671
  %v792 = vpop.f32.mrb[0].mxu0
  %v793 = vadd.f32 %v724, %v792
  %v794 = vpop.f32.mrb[0].mxu0
  %795 = vmatprep.mubr.f32.mxu0 0.0
  %796 = vmatmul.mubr.f32.gmra.mrb[0].mxu0 %v672
  %v797 = vpop.f32.mrb[0].mxu0
  %v798 = vadd.f32 %v724, %v797
  %v799 = vpop.f32.mrb[0].mxu0
  %800 = vmatprep.mubr.f32.mxu0 0.0
  %801 = vmatmul.mubr.f32.gmra.mrb[0].mxu0 %v673
  %v802 = vpop.f32.mrb[0].mxu0
  %v803 = vadd.f32 %v724, %v802
  %v804 = vpop.f32.mrb[0].mxu0
  %805 = vmatprep.mubr.f32.mxu0 0.0
  %806 = vmatmul.mubr.f32.gmra.mrb[0].mxu0 %v674
  %v807 = vpop.f32.mrb[0].mxu0
  %v808 = vadd.f32 %v724, %v807
  %v809 = vpop.f32.mrb[0].mxu0
  %810 = vmatprep.mubr.f32.mxu0 0.0
  %811 = vmatmul.mubr.f32.gmra.mrb[0].mxu0 %v675
  %v812 = vpop.f32.mrb[0].mxu0
  %v813 = vadd.f32 %v724, %v812
  %v814 = vpop.f32.mrb[0].mxu0
  %815 = vmatprep.mubr.f32.mxu0 0.0
  %816 = vmatmul.mubr.f32.gmra.mrb[0].mxu0 %v676
  %v817 = vpop.f32.mrb[0].mxu0
  %v818 = vadd.f32 %v724, %v817
  %v819 = vpop.f32.mrb[0].mxu0
  %820 = vmatprep.mubr.f32.mxu0 0.0
  %821 = vmatmul.mubr.f32.gmra.mrb[0].mxu0 %v677
  %v822 = vpop.f32.mrb[0].mxu0
  %v823 = vadd.f32 %v724, %v822
  %v824 = vpop.f32.mrb[0].mxu0
  %825 = vmatprep.mubr.f32.mxu0 0.0
  %826 = vmatmul.mubr.f32.gmra.mrb[0].mxu0 %v678
  %v827 = vpop.f32.mrb[0].mxu0
  %v828 = vadd.f32 %v724, %v827
  %v829 = vpop.f32.mrb[0].mxu0
  %830 = vmatprep.mubr.f32.mxu0 0.0
  %831 = vmatmul.mubr.f32.gmra.mrb[0].mxu0 %v679
  %v832 = vpop.f32.mrb[0].mxu0
  %v833 = vadd.f32 %v724, %v832
  %v834 = vpop.f32.mrb[0].mxu0
  %835 = vmatprep.mubr.f32.mxu0 0.0
  %836 = vmatmul.mubr.f32.gmra.mrb[0].mxu0 %v680
  %v837 = vpop.f32.mrb[0].mxu0
  %v838 = vadd.f32 %v724, %v837
  %v839 = vpop.f32.mrb[0].mxu0
  %840 = vmatprep.mubr.f32.mxu0 0.0
  %841 = vmatmul.mubr.f32.gmra.mrb[0].mxu0 %v681
  %v842 = vpop.f32.mrb[0].mxu0
  %v843 = vadd.f32 %v724, %v842
  %v844 = vpop.f32.mrb[0].mxu0
  %845 = vmatprep.mubr.f32.mxu0 0.0
  %846 = vmatmul.mubr.f32.gmra.mrb[0].mxu0 %v682
  %v847 = vpop.f32.mrb[0].mxu0
  %v848 = vadd.f32 %v724, %v847
  %v849 = vpop.f32.mrb[0].mxu0
  %850 = vmatprep.mubr.f32.mxu0 0.0
  %851 = vmatmul.mubr.f32.gmra.mrb[0].mxu0 %v683
  %v852 = vpop.f32.mrb[0].mxu0
  %v853 = vadd.f32 %v724, %v852
  %v854 = vpop.f32.mrb[0].mxu0
  %855 = vmatprep.mubr.f32.mxu0 0.0
  %856 = vmatmul.mubr.f32.gmra.mrb[0].mxu0 %v684
  %v857 = vpop.f32.mrb[0].mxu0
  %v858 = vadd.f32 %v724, %v857
  %v859 = vpop.f32.mrb[0].mxu0
  %860 = vmatprep.mubr.f32.mxu0 0.0
  %861 = vmatmul.mubr.f32.gmra.mrb[0].mxu0 %v685
  %v862 = vpop.f32.mrb[0].mxu0
  %v863 = vadd.f32 %v724, %v862
  %v864 = vpop.f32.mrb[0].mxu0
  %865 = vmatprep.mubr.f32.mxu0 0.0
  %866 = vmatmul.mubr.f32.gmra.mrb[0].mxu0 %v686
  %v867 = vpop.f32.mrb[0].mxu0
  %v868 = vadd.f32 %v724, %v867
  %v869 = vpop.f32.mrb[0].mxu0
  %870 = vmatprep.mubr.f32.mxu0 0.0
  %871 = vmatmul.mubr.f32.gmra.mrb[0].mxu0 %v687
  %v872 = vpop.f32.mrb[0].mxu0
  %v873 = vadd.f32 %v724, %v872
  %v874 = vpop.f32.mrb[0].mxu0
  %875 = vmatprep.mubr.f32.mxu0 0.0
  %876 = vmatmul.mubr.f32.gmra.mrb[0].mxu0 %v688
  %v877 = vpop.f32.mrb[0].mxu0
  %v878 = vadd.f32 %v724, %v877
  %v879 = vpop.f32.mrb[0].mxu0
  %880 = vmatprep.mubr.f32.mxu0 0.0
  %881 = vmatmul.mubr.f32.gmra.mrb[0].mxu0 %v689
  %v882 = vpop.f32.mrb[0].mxu0
  %v883 = vadd.f32 %v724, %v882
  %v884 = vpop.f32.mrb[0].mxu0
  %885 = vmatprep.mubr.f32.mxu0 0.0
  %886 = vmatmul.mubr.f32.gmra.mrb[0].mxu0 %v690
  %v887 = vpop.f32.mrb[0].mxu0
  %v888 = vadd.f32 %v724, %v887
  %v889 = vpop.f32.mrb[0].mxu0
  %890 = vmatprep.mubr.f32.mxu0 0.0
  %891 = vmatmul.mubr.f32.gmra.mrb[0].mxu0 %v691
  %v892 = vpop.f32.mrb[0].mxu0
  %v893 = vadd.f32 %v724, %v892
  %v894 = vpop.f32.mrb[0].mxu0
  %895 = vmatprep.mubr.f32.mxu0 0.0
  %896 = vmatmul.mubr.f32.gmra.mrb[0].mxu0 %v692
  %v897 = vpop.f32.mrb[0].mxu0
  %v898 = vadd.f32 %v724, %v897
  %v899 = vpop.f32.mrb[0].mxu0
  %900 = vmatprep.mubr.f32.mxu0 0.0
  %901 = vmatmul.mubr.f32.gmra.mrb[0].mxu0 %v693
  %v902 = vpop.f32.mrb[0].mxu0
  %v903 = vadd.f32 %v724, %v902
  %v904 = vpop.f32.mrb[0].mxu0
  %905 = vmatprep.mubr.f32.mxu0 0.0
  %906 = vmatmul.mubr.f32.gmra.mrb[0].mxu0 %v694
  %v907 = vpop.f32.mrb[0].mxu0
  %v908 = vadd.f32 %v724, %v907
  %v909 = vpop.f32.mrb[0].mxu0
  %910 = vmatprep.mubr.f32.mxu0 0.0
  %911 = vmatmul.mubr.f32.gmra.mrb[0].mxu0 %v695
  %v912 = vpop.f32.mrb[0].mxu0
  %v913 = vadd.f32 %v724, %v912
  %v914 = vpop.f32.mrb[0].mxu0
  %915 = vmatprep.mubr.f32.mxu0 0.0
  %916 = vmatmul.mubr.f32.gmra.mrb[0].mxu0 %v696
  %v917 = vpop.f32.mrb[0].mxu0
  %v918 = vadd.f32 %v724, %v917
  %v919 = vpop.f32.mrb[0].mxu0
  %920 = vmatprep.mubr.f32.mxu0 0.0
  %921 = vmatmul.mubr.f32.gmra.mrb[0].mxu0 %v697
  %v922 = vpop.f32.mrb[0].mxu0
  %v923 = vadd.f32 %v724, %v922
  %v924 = vpop.f32.mrb[0].mxu0
  %925 = vmatprep.mubr.f32.mxu0 0.0
  %926 = vmatmul.mubr.f32.gmra.mrb[0].mxu0 %v698
  %v927 = vpop.f32.mrb[0].mxu0
  %v928 = vadd.f32 %v724, %v927
  %v929 = vpop.f32.mrb[0].mxu0
  %930 = vmatprep.mubr.f32.mxu0 0.0
  %931 = vmatmul.mubr.f32.gmra.mrb[0].mxu0 %v699
  %v932 = vpop.f32.mrb[0].mxu0
  %v933 = vadd.f32 %v724, %v932
  %v934 = vpop.f32.mrb[0].mxu0
  %935 = vmatprep.mubr.f32.mxu0 0.0
  %936 = vmatmul.mubr.f32.gmra.mrb[0].mxu0 %v700
  %v937 = vpop.f32.mrb[0].mxu0
  %v938 = vadd.f32 %v724, %v937
  %v939 = vpop.f32.mrb[0].mxu0
  %940 = vmatprep.mubr.f32.mxu0 0.0
  %941 = vmatmul.mubr.f32.gmra.mrb[0].mxu0 %v701
  %v942 = vpop.f32.mrb[0].mxu0
  %v943 = vadd.f32 %v724, %v942
  %v944 = vpop.f32.mrb[0].mxu0
  %945 = vmatprep.mubr.f32.mxu0 0.0
  %946 = vmatmul.mubr.f32.gmra.mrb[0].mxu0 %v702
  %v947 = vpop.f32.mrb[0].mxu0
  %v948 = vadd.f32 %v724, %v947
  %v949 = vpop.f32.mrb[0].mxu0
  %950 = vdwg.mxu0
  %v951 = vtanh.pop %v793
  %v952 = vtanh.pop %v798
  %v953 = vtanh.pop %v803
  %v954 = vtanh.pop %v808
  %v955 = vtanh.pop %v813
  %v956 = vtanh.pop %v818
  %v957 = vtanh.pop %v823
  %v958 = vtanh.pop %v828
  %v959 = vtanh.pop %v833
  %v960 = vtanh.pop %v838
  %v961 = vtanh.pop %v843
  %v962 = vtanh.pop %v848
  %v963 = vtanh.pop %v853
  %v964 = vtanh.pop %v858
  %v965 = vtanh.pop %v863
  %v966 = vtanh.pop %v868
  %v967 = vtanh.pop %v873
  %v968 = vtanh.pop %v878
  %v969 = vtanh.pop %v883
  %v970 = vtanh.pop %v888
  %v971 = vtanh.pop %v893
  %v972 = vtanh.pop %v898
  %v973 = vtanh.pop %v903
  %v974 = vtanh.pop %v908
  %v975 = vtanh.pop %v913
  %v976 = vtanh.pop %v918
  %v977 = vtanh.pop %v923
  %v978 = vtanh.pop %v928
  %v979 = vtanh.pop %v933
  %v980 = vtanh.pop %v938
  %v981 = vtanh.pop %v943
  %v982 = vtanh.pop %v948
  %983 = vst.msk [vmem:[%s7] sm:$0xff] %vm69, %v951
  %984 = vst.msk [vmem:[%s7 + $0x8] sm:$0xff] %vm69, %v952
  %985 = vst.msk [vmem:[%s7 + $0x10] sm:$0xff] %vm69, %v953
  %986 = vst.msk [vmem:[%s7 + $0x18] sm:$0xff] %vm69, %v954
  %987 = vst.msk [vmem:[%s7 + $0x20] sm:$0xff] %vm69, %v955
  %988 = vst.msk [vmem:[%s7 + $0x28] sm:$0xff] %vm69, %v956
  %989 = vst.msk [vmem:[%s7 + $0x30] sm:$0xff] %vm69, %v957
  %990 = vst.msk [vmem:[%s7 + $0x38] sm:$0xff] %vm69, %v958
  %991 = vst.msk [vmem:[%s7 + $0x40] sm:$0xff] %vm69, %v959
  %992 = vst.msk [vmem:[%s7 + $0x48] sm:$0xff] %vm69, %v960
  %993 = vst.msk [vmem:[%s7 + $0x50] sm:$0xff] %vm69, %v961
  %994 = vst.msk [vmem:[%s7 + $0x58] sm:$0xff] %vm69, %v962
  %995 = vst.msk [vmem:[%s7 + $0x60] sm:$0xff] %vm69, %v963
  %996 = vst.msk [vmem:[%s7 + $0x68] sm:$0xff] %vm69, %v964
  %997 = vst.msk [vmem:[%s7 + $0x70] sm:$0xff] %vm69, %v965
  %998 = vst.msk [vmem:[%s7 + $0x78] sm:$0xff] %vm69, %v966
  %999 = vst.msk [vmem:[%s7 + $0x80] sm:$0xff] %vm69, %v967
  %1000 = vst.msk [vmem:[%s7 + $0x88] sm:$0xff] %vm69, %v968
  %1001 = vst.msk [vmem:[%s7 + $0x90] sm:$0xff] %vm69, %v969
  %1002 = vst.msk [vmem:[%s7 + $0x98] sm:$0xff] %vm69, %v970
  %1003 = vst.msk [vmem:[%s7 + $0xa0] sm:$0xff] %vm69, %v971
  %1004 = vst.msk [vmem:[%s7 + $0xa8] sm:$0xff] %vm69, %v972
  %1005 = vst.msk [vmem:[%s7 + $0xb0] sm:$0xff] %vm69, %v973
  %1006 = vst.msk [vmem:[%s7 + $0xb8] sm:$0xff] %vm69, %v974
  %1007 = vst.msk [vmem:[%s7 + $0xc0] sm:$0xff] %vm69, %v975
  %1008 = vst.msk [vmem:[%s7 + $0xc8] sm:$0xff] %vm69, %v976
  %1009 = vst.msk [vmem:[%s7 + $0xd0] sm:$0xff] %vm69, %v977
  %1010 = vst.msk [vmem:[%s7 + $0xd8] sm:$0xff] %vm69, %v978
  %1011 = vst.msk [vmem:[%s7 + $0xe0] sm:$0xff] %vm69, %v979
  %1012 = vst.msk [vmem:[%s7 + $0xe8] sm:$0xff] %vm69, %v980
  %1013 = vst.msk [vmem:[%s7 + $0xf0] sm:$0xff] %vm69, %v981
  %1014 = vst.msk [vmem:[%s7 + $0xf8] sm:$0xff] %vm69, %v982
  // Predicated region
  $region30: #{tpu_custom_call.1} parent=0 // pred_check
    _
  $region31: #{tpu_custom_call.1} parent=0 // pred_check_branch
    %1016 = sbr.rel (0) target = $region33
  $region32: #{tpu_custom_call.1} parent=0 // pred_region
    _
  $region33: #{tpu_custom_call.1} parent=0 // pred_fallthru
    _
  // Predicated region
  $region34: #{tpu_custom_call.1} parent=0 // pred_check
    _
  $region35: #{tpu_custom_call.1} parent=0 // pred_check_branch
    %1018 = sbr.rel (0) target = $region37
  $region36: #{tpu_custom_call.1} parent=0 // pred_region
    _
  $region37: #{tpu_custom_call.1} parent=0 // pred_fallthru
    _

</llo_original>
